<compile_context>
chip_gen: v6e
topology: v6e:2x2x1
jax: 0.10.0
libtpu: 0.0.40
codegen_flags: <defaults>
</compile_context>

<pallas_src>
import math

import jax
import jax.numpy as jnp
from jax import lax
from jax.experimental import pallas as pl
from jax.experimental.pallas import tpu as pltpu

_LANES = 128
_MAX_BLOCK_ROWS = 4096   # 2 MiB f32 tile; in+out double-buffered = 8 MiB total.
_ROW_ALIGN = 16          # tile halves must be >= 8 sublanes; also bf16 packing unit.

# Hash constants (lowbias32 / murmur-style), expressed as wrapped int32 literals.
_M1 = 0x7FEB352D          #  2146121005
_M2 = -2073450869         #  0x846CA68B
_GOLD = -1640531527       #  0x9E3779B9
_C1 = -2049892933         #  0x85EBCA6B
_ONE_BITS = 0x3F800000    # f32 bit pattern of 1.0


def _round_up(x, m):
    return ((x + m - 1) // m) * m


def _shr(x, n):
    """Logical right shift of int32 values by a static amount."""
    return lax.shift_right_logical(x, jnp.int32(n))


def _hash32(x):
    """Murmur3-style avalanche finalizer on int32 (wrapping mul / xor / shift)."""
    x = x ^ _shr(x, 16)
    x = x * jnp.int32(_M1)
    x = x ^ _shr(x, 15)
    x = x * jnp.int32(_M2)
    x = x ^ _shr(x, 16)
    return x


def _cos_2pi(u):
    """cos(2*pi*u) for u in [0, 1): branch-free range reduction + even polynomial."""
    v = jnp.abs(u - 0.5)                    # [0, 0.5]; cos(2*pi*u) = -cos(2*pi*v)
    flip = v > 0.25
    w = jnp.where(flip, 0.5 - v, v)         # [0, 0.25]
    t2 = jnp.square(w * jnp.float32(2.0 * math.pi))
    c = 1.0 + t2 * (-0.5 + t2 * (1.0 / 24.0
                                 + t2 * (-1.0 / 720.0 + t2 * (1.0 / 40320.0))))
    return jnp.where(flip, c, -c)


def _splice_uniform_bits(bits):
    """Map hashed int32 bits -> f32 in [1, 2) via exponent splice (bitcast is free)."""
    mant = jnp.int32(_ONE_BITS) | _shr(bits, 9)
    return pltpu.bitcast(mant, jnp.float32)


def _gaussian_noise_kernel(seed_ref, params_ref, x_ref, o_ref):
    # seed_ref  : SMEM int32[1]  -- PRNG seed (scalar-prefetched)
    # params_ref: SMEM f32[2]    -- [sigma, mean] (scalar-prefetched)
    # x_ref/o_ref: VMEM (block_rows, 128) tiles of the flattened image slab.
    block_rows, lanes = x_ref.shape
    half = block_rows // 2
    pid = pl.program_id(0)

    # Hashes / uniforms / Box-Muller radius computed for HALF the tile only;
    # each pair yields two independent normals (cos & sin branches).
    row = lax.broadcasted_iota(jnp.int32, (half, lanes), 0)
    lane = lax.broadcasted_iota(jnp.int32, (half, lanes), 1)
    base = pid * jnp.int32(half * lanes)            # scalar (hoisted off VALU)
    idx = base + row * lanes + lane                 # *128 lowers to a shift

    k = idx + seed_ref[0] * jnp.int32(_GOLD)
    b1 = _hash32(k ^ jnp.int32(_C1))
    # Cheap remix instead of a second full avalanche hash (3 VALU ops on half tile).
    b2 = (b1 ^ _shr(b1, 16)) * jnp.int32(_GOLD)

    # Exponent-splice uniforms: f in [1,2); u1 = 2-f in (0,1] (log-safe), u2 = f-1 in [0,1).
    u1 = jnp.float32(2.0) - _splice_uniform_bits(b1)
    u2 = _splice_uniform_bits(b2) - jnp.float32(1.0)

    # Box-Muller: (r*cos(2*pi*u2), r*sin(2*pi*u2)) are two independent N(0,1).
    r = jnp.sqrt(-2.0 * jnp.log(u1))
    noise_a = r * _cos_2pi(u2)
    u2s = jnp.where(u2 >= 0.25, u2 - 0.25, u2 + 0.75)   # phase shift -> sin branch
    noise_b = r * _cos_2pi(u2s)

    sigma = params_ref[0]
    mean = params_ref[1]

    out_a = x_ref[:half, :].astype(jnp.float32) + noise_a * sigma + mean
    out_b = x_ref[half:, :].astype(jnp.float32) + noise_b * sigma + mean
    o_ref[:half, :] = out_a.astype(o_ref.dtype)
    o_ref[half:, :] = out_b.astype(o_ref.dtype)


def gaussian_noise_pallas(image, *, mean, sigma_range, key):
    """Apply Gaussian noise to `image` (any shape) exactly like the torch module."""
    sigma_min, sigma_max = sigma_range
    # sigma drawn once per forward (matches torch.empty(1).uniform_(min, max).item()).
    key_sigma, key_seed = jax.random.split(key)
    sigma = jax.random.uniform(key_sigma, (), jnp.float32, sigma_min, sigma_max)
    seed = jax.random.randint(key_seed, (1,), 0, 2**31 - 1, dtype=jnp.int32)
    params = jnp.stack([sigma, jnp.float32(mean)]).astype(jnp.float32)

    orig_shape = image.shape
    orig_dtype = image.dtype
    # TODO(synk): integer image dtypes would truncate the float noise on the cast
    # back to orig_dtype; float inputs (as in the torch usage) are exact.
    flat = image.reshape(-1)
    total = flat.shape[0]

    rows = pl.cdiv(total, _LANES)
    # Pad only to a (16 sublane x 128 lane) multiple -- at most 2047 elements --
    # never to a full block multiple; ragged last blocks are masked by Pallas.
    padded_rows = _round_up(max(rows, _ROW_ALIGN), _ROW_ALIGN)
    padded_total = padded_rows * _LANES
    if padded_total != total:
        flat = jnp.pad(flat, (0, padded_total - total))
    x2d = flat.reshape(padded_rows, _LANES)

    if padded_rows <= 2 * _ROW_ALIGN:
        block_rows = padded_rows                     # too small to split usefully
    else:
        # >= 2 grid steps (keeps both v7x TensorCores fed), capped at 4096 rows
        # (2 MiB f32 tile; 8 MiB double-buffered fits v5e's scoped-VMEM default).
        block_rows = min(_MAX_BLOCK_ROWS,
                         _round_up(pl.cdiv(padded_rows, 2), _ROW_ALIGN))
    grid = (pl.cdiv(padded_rows, block_rows),)

    n = padded_total
    cost = pl.CostEstimate(
        flops=22 * n,
        transcendentals=n,
        bytes_accessed=2 * n * x2d.dtype.itemsize,
    )

    out2d = pl.pallas_call(
        _gaussian_noise_kernel,
        out_shape=jax.ShapeDtypeStruct((padded_rows, _LANES), orig_dtype),
        grid_spec=pltpu.PrefetchScalarGridSpec(
            num_scalar_prefetch=2,  # seed, params -> SMEM
            grid=grid,
            in_specs=[pl.BlockSpec((block_rows, _LANES), lambda i, *_: (i, 0))],
            out_specs=pl.BlockSpec((block_rows, _LANES), lambda i, *_: (i, 0)),
        ),
        compiler_params=pltpu.CompilerParams(
            dimension_semantics=("parallel",),
            vmem_limit_bytes=32 * 1024 * 1024,
        ),
        cost_estimate=cost,
    )(seed, params, x2d)

    if padded_total != total:
        return out2d.reshape(-1)[:total].reshape(orig_shape)
    return out2d.reshape(orig_shape)


if __name__ == "__main__":
    # Module "parameters" (from __init__ signature): mean, sigma=(min, max)
    MEAN = 0.2
    SIGMA = (0.1, 0.5)

    key = jax.random.PRNGKey(0)
    key_x, key_noise = jax.random.split(key)

    # NCHW image batch, small shapes: B=2, C=4, H=16, W=16
    x = jax.random.normal(key_x, (2, 4, 16, 16), dtype=jnp.float32)

    y = gaussian_noise_pallas(x, mean=MEAN, sigma_range=SIGMA, key=key_noise)
    y = jax.block_until_ready(y)

    assert y.shape == x.shape and y.dtype == x.dtype
    res = (y - x).reshape(-1)
    res_mean = float(jnp.mean(res))
    res_std = float(jnp.std(res))
    # Output must differ from input; residual statistics ~ N(MEAN, sigma^2).
    assert not bool(jnp.allclose(y, x))
    assert abs(res_mean - MEAN) < 0.1, res_mean
    assert 0.05 < res_std < 0.8, res_std

    print("KERNEL_OK")
</pallas_src>

<mosaic_0001>
module attributes {stable_mosaic.version = 11 : i64} {
  func.func @_gaussian_noise_kernel(%arg0: i32, %arg1: memref<1xi32, #tpu.memory_space<smem>>, %arg2: memref<2xf32, #tpu.memory_space<smem>>, %arg3: memref<16x128xf32, #tpu.memory_space<vmem>>, %arg4: memref<16x128xf32, #tpu.memory_space<vmem>>) attributes {dimension_semantics = [#tpu.dimension_semantics<parallel>], iteration_bounds = array<i64: 1>, scalar_prefetch = 2 : i64, scratch_operands = 0 : i64, tpu.core_type = #tpu.core_type<tc>, window_params = [{transform_indices = @transform_0, window_bounds = array<i64: 16, 128>}, {transform_indices = @transform_1, window_bounds = array<i64: 16, 128>}]} {
    %0 = tpu.iota {dimensions = array<i32: 0>} : vector<8x128xi32>
    %1 = tpu.iota {dimensions = array<i32: 1>} : vector<8x128xi32>
    %c1024_i32 = arith.constant 1024 : i32
    %2 = arith.muli %arg0, %c1024_i32 : i32
    %c128_i32 = arith.constant 128 : i32
    %3 = vector.broadcast %c128_i32 : i32 to vector<8x128xi32>
    %4 = arith.muli %0, %3 : vector<8x128xi32>
    %5 = vector.broadcast %2 : i32 to vector<8x128xi32>
    %6 = arith.addi %5, %4 : vector<8x128xi32>
    %7 = arith.addi %6, %1 : vector<8x128xi32>
    %c0 = arith.constant 0 : index
    %8 = memref.load %arg1[%c0] : memref<1xi32, #tpu.memory_space<smem>>
    %c-1640531527_i32 = arith.constant -1640531527 : i32
    %9 = arith.muli %8, %c-1640531527_i32 : i32
    %10 = vector.broadcast %9 : i32 to vector<8x128xi32>
    %11 = arith.addi %7, %10 : vector<8x128xi32>
    %c-2049892933_i32 = arith.constant -2049892933 : i32
    %12 = vector.broadcast %c-2049892933_i32 : i32 to vector<8x128xi32>
    %13 = arith.xori %11, %12 : vector<8x128xi32>
    %c16_i32 = arith.constant 16 : i32
    %14 = vector.broadcast %c16_i32 : i32 to vector<8x128xi32>
    %15 = arith.shrui %13, %14 : vector<8x128xi32>
    %16 = arith.xori %13, %15 : vector<8x128xi32>
    %c2146121005_i32 = arith.constant 2146121005 : i32
    %17 = vector.broadcast %c2146121005_i32 : i32 to vector<8x128xi32>
    %18 = arith.muli %16, %17 : vector<8x128xi32>
    %c15_i32 = arith.constant 15 : i32
    %19 = vector.broadcast %c15_i32 : i32 to vector<8x128xi32>
    %20 = arith.shrui %18, %19 : vector<8x128xi32>
    %21 = arith.xori %18, %20 : vector<8x128xi32>
    %c-2073450869_i32 = arith.constant -2073450869 : i32
    %22 = vector.broadcast %c-2073450869_i32 : i32 to vector<8x128xi32>
    %23 = arith.muli %21, %22 : vector<8x128xi32>
    %c16_i32_0 = arith.constant 16 : i32
    %24 = vector.broadcast %c16_i32_0 : i32 to vector<8x128xi32>
    %25 = arith.shrui %23, %24 : vector<8x128xi32>
    %26 = arith.xori %23, %25 : vector<8x128xi32>
    %c16_i32_1 = arith.constant 16 : i32
    %27 = vector.broadcast %c16_i32_1 : i32 to vector<8x128xi32>
    %28 = arith.shrui %26, %27 : vector<8x128xi32>
    %29 = arith.xori %26, %28 : vector<8x128xi32>
    %c-1640531527_i32_2 = arith.constant -1640531527 : i32
    %30 = vector.broadcast %c-1640531527_i32_2 : i32 to vector<8x128xi32>
    %31 = arith.muli %29, %30 : vector<8x128xi32>
    %c9_i32 = arith.constant 9 : i32
    %32 = vector.broadcast %c9_i32 : i32 to vector<8x128xi32>
    %33 = arith.shrui %26, %32 : vector<8x128xi32>
    %c1065353216_i32 = arith.constant 1065353216 : i32
    %34 = vector.broadcast %c1065353216_i32 : i32 to vector<8x128xi32>
    %35 = arith.ori %34, %33 : vector<8x128xi32>
    %36 = tpu.bitcast %35 : vector<8x128xi32> -> vector<8x128xf32>
    %cst = arith.constant 2.000000e+00 : f32
    %37 = vector.broadcast %cst : f32 to vector<8x128xf32>
    %38 = arith.subf %37, %36 : vector<8x128xf32>
    %c9_i32_3 = arith.constant 9 : i32
    %39 = vector.broadcast %c9_i32_3 : i32 to vector<8x128xi32>
    %40 = arith.shrui %31, %39 : vector<8x128xi32>
    %c1065353216_i32_4 = arith.constant 1065353216 : i32
    %41 = vector.broadcast %c1065353216_i32_4 : i32 to vector<8x128xi32>
    %42 = arith.ori %41, %40 : vector<8x128xi32>
    %43 = tpu.bitcast %42 : vector<8x128xi32> -> vector<8x128xf32>
    %cst_5 = arith.constant 1.000000e+00 : f32
    %44 = vector.broadcast %cst_5 : f32 to vector<8x128xf32>
    %45 = arith.subf %43, %44 : vector<8x128xf32>
    %46 = math.log %38 : vector<8x128xf32>
    %cst_6 = arith.constant -2.000000e+00 : f32
    %47 = vector.broadcast %cst_6 : f32 to vector<8x128xf32>
    %48 = arith.mulf %47, %46 : vector<8x128xf32>
    %49 = math.sqrt %48 : vector<8x128xf32>
    %cst_7 = arith.constant 5.000000e-01 : f32
    %50 = vector.broadcast %cst_7 : f32 to vector<8x128xf32>
    %51 = arith.subf %45, %50 : vector<8x128xf32>
    %52 = math.absf %51 : vector<8x128xf32>
    %cst_8 = arith.constant 2.500000e-01 : f32
    %53 = vector.broadcast %cst_8 : f32 to vector<8x128xf32>
    %54 = arith.cmpf ogt, %52, %53 : vector<8x128xf32>
    %cst_9 = arith.constant 5.000000e-01 : f32
    %55 = vector.broadcast %cst_9 : f32 to vector<8x128xf32>
    %56 = arith.subf %55, %52 : vector<8x128xf32>
    %57 = arith.select %54, %56, %52 : vector<8x128xi1>, vector<8x128xf32>
    %cst_10 = arith.constant 6.28318548 : f32
    %58 = vector.broadcast %cst_10 : f32 to vector<8x128xf32>
    %59 = arith.mulf %57, %58 : vector<8x128xf32>
    %60 = arith.mulf %59, %59 : vector<8x128xf32>
    %cst_11 = arith.constant 2.48015876E-5 : f32
    %61 = vector.broadcast %cst_11 : f32 to vector<8x128xf32>
    %62 = arith.mulf %60, %61 : vector<8x128xf32>
    %cst_12 = arith.constant -0.00138888892 : f32
    %63 = vector.broadcast %cst_12 : f32 to vector<8x128xf32>
    %64 = arith.addf %63, %62 : vector<8x128xf32>
    %65 = arith.mulf %60, %64 : vector<8x128xf32>
    %cst_13 = arith.constant 0.0416666679 : f32
    %66 = vector.broadcast %cst_13 : f32 to vector<8x128xf32>
    %67 = arith.addf %66, %65 : vector<8x128xf32>
    %68 = arith.mulf %60, %67 : vector<8x128xf32>
    %cst_14 = arith.constant -5.000000e-01 : f32
    %69 = vector.broadcast %cst_14 : f32 to vector<8x128xf32>
    %70 = arith.addf %69, %68 : vector<8x128xf32>
    %71 = arith.mulf %60, %70 : vector<8x128xf32>
    %cst_15 = arith.constant 1.000000e+00 : f32
    %72 = vector.broadcast %cst_15 : f32 to vector<8x128xf32>
    %73 = arith.addf %72, %71 : vector<8x128xf32>
    %cst_16 = arith.constant 0.000000e+00 : f32
    %74 = vector.broadcast %cst_16 : f32 to vector<8x128xf32>
    %75 = arith.subf %74, %73 : vector<8x128xf32>
    %76 = arith.select %54, %73, %75 : vector<8x128xi1>, vector<8x128xf32>
    %77 = arith.mulf %49, %76 : vector<8x128xf32>
    %cst_17 = arith.constant 2.500000e-01 : f32
    %78 = vector.broadcast %cst_17 : f32 to vector<8x128xf32>
    %79 = arith.cmpf oge, %45, %78 : vector<8x128xf32>
    %cst_18 = arith.constant 2.500000e-01 : f32
    %80 = vector.broadcast %cst_18 : f32 to vector<8x128xf32>
    %81 = arith.subf %45, %80 : vector<8x128xf32>
    %cst_19 = arith.constant 7.500000e-01 : f32
    %82 = vector.broadcast %cst_19 : f32 to vector<8x128xf32>
    %83 = arith.addf %45, %82 : vector<8x128xf32>
    %84 = arith.select %79, %81, %83 : vector<8x128xi1>, vector<8x128xf32>
    %cst_20 = arith.constant 5.000000e-01 : f32
    %85 = vector.broadcast %cst_20 : f32 to vector<8x128xf32>
    %86 = arith.subf %84, %85 : vector<8x128xf32>
    %87 = math.absf %86 : vector<8x128xf32>
    %cst_21 = arith.constant 2.500000e-01 : f32
    %88 = vector.broadcast %cst_21 : f32 to vector<8x128xf32>
    %89 = arith.cmpf ogt, %87, %88 : vector<8x128xf32>
    %cst_22 = arith.constant 5.000000e-01 : f32
    %90 = vector.broadcast %cst_22 : f32 to vector<8x128xf32>
    %91 = arith.subf %90, %87 : vector<8x128xf32>
    %92 = arith.select %89, %91, %87 : vector<8x128xi1>, vector<8x128xf32>
    %cst_23 = arith.constant 6.28318548 : f32
    %93 = vector.broadcast %cst_23 : f32 to vector<8x128xf32>
    %94 = arith.mulf %92, %93 : vector<8x128xf32>
    %95 = arith.mulf %94, %94 : vector<8x128xf32>
    %cst_24 = arith.constant 2.48015876E-5 : f32
    %96 = vector.broadcast %cst_24 : f32 to vector<8x128xf32>
    %97 = arith.mulf %95, %96 : vector<8x128xf32>
    %cst_25 = arith.constant -0.00138888892 : f32
    %98 = vector.broadcast %cst_25 : f32 to vector<8x128xf32>
    %99 = arith.addf %98, %97 : vector<8x128xf32>
    %100 = arith.mulf %95, %99 : vector<8x128xf32>
    %cst_26 = arith.constant 0.0416666679 : f32
    %101 = vector.broadcast %cst_26 : f32 to vector<8x128xf32>
    %102 = arith.addf %101, %100 : vector<8x128xf32>
    %103 = arith.mulf %95, %102 : vector<8x128xf32>
    %cst_27 = arith.constant -5.000000e-01 : f32
    %104 = vector.broadcast %cst_27 : f32 to vector<8x128xf32>
    %105 = arith.addf %104, %103 : vector<8x128xf32>
    %106 = arith.mulf %95, %105 : vector<8x128xf32>
    %cst_28 = arith.constant 1.000000e+00 : f32
    %107 = vector.broadcast %cst_28 : f32 to vector<8x128xf32>
    %108 = arith.addf %107, %106 : vector<8x128xf32>
    %cst_29 = arith.constant 0.000000e+00 : f32
    %109 = vector.broadcast %cst_29 : f32 to vector<8x128xf32>
    %110 = arith.subf %109, %108 : vector<8x128xf32>
    %111 = arith.select %89, %108, %110 : vector<8x128xi1>, vector<8x128xf32>
    %112 = arith.mulf %49, %111 : vector<8x128xf32>
    %c0_30 = arith.constant 0 : index
    %113 = memref.load %arg2[%c0_30] : memref<2xf32, #tpu.memory_space<smem>>
    %c1 = arith.constant 1 : index
    %114 = memref.load %arg2[%c1] : memref<2xf32, #tpu.memory_space<smem>>
    %c0_31 = arith.constant 0 : index
    %c0_32 = arith.constant 0 : index
    %115 = vector.load %arg3[%c0_31, %c0_32] : memref<16x128xf32, #tpu.memory_space<vmem>>, vector<8x128xf32>
    %116 = vector.broadcast %113 : f32 to vector<8x128xf32>
    %117 = arith.mulf %77, %116 : vector<8x128xf32>
    %118 = arith.addf %115, %117 : vector<8x128xf32>
    %119 = vector.broadcast %114 : f32 to vector<8x128xf32>
    %120 = arith.addf %118, %119 : vector<8x128xf32>
    %c8 = arith.constant 8 : index
    %c0_33 = arith.constant 0 : index
    %121 = vector.load %arg3[%c8, %c0_33] : memref<16x128xf32, #tpu.memory_space<vmem>>, vector<8x128xf32>
    %122 = vector.broadcast %113 : f32 to vector<8x128xf32>
    %123 = arith.mulf %112, %122 : vector<8x128xf32>
    %124 = arith.addf %121, %123 : vector<8x128xf32>
    %125 = vector.broadcast %114 : f32 to vector<8x128xf32>
    %126 = arith.addf %124, %125 : vector<8x128xf32>
    %c0_34 = arith.constant 0 : index
    %c0_35 = arith.constant 0 : index
    %127 = vector.load %arg4[%c0_34, %c0_35] : memref<16x128xf32, #tpu.memory_space<vmem>>, vector<8x128xf32>
    tpu.vector_store %arg4[%c0_34, %c0_35], %120 {strides = array<i32>} : memref<16x128xf32, #tpu.memory_space<vmem>>, vector<8x128xf32>,
    %c8_36 = arith.constant 8 : index
    %c0_37 = arith.constant 0 : index
    %128 = vector.load %arg4[%c8_36, %c0_37] : memref<16x128xf32, #tpu.memory_space<vmem>>, vector<8x128xf32>
    tpu.vector_store %arg4[%c8_36, %c0_37], %126 {strides = array<i32>} : memref<16x128xf32, #tpu.memory_space<vmem>>, vector<8x128xf32>,
    return
  }
  func.func @transform_0(%arg0: i32, %arg1: memref<1xi32, #tpu.memory_space<smem>>, %arg2: memref<2xf32, #tpu.memory_space<smem>>) -> (i32, i32) {
    %c0_i32 = arith.constant 0 : i32
    %c0_i32_0 = arith.constant 0 : i32
    return %arg0, %c0_i32 : i32, i32
  }
  func.func @transform_1(%arg0: i32, %arg1: memref<1xi32, #tpu.memory_space<smem>>, %arg2: memref<2xf32, #tpu.memory_space<smem>>) -> (i32, i32) {
    %c0_i32 = arith.constant 0 : i32
    %c0_i32_0 = arith.constant 0 : i32
    return %arg0, %c0_i32 : i32, i32
  }
}

</mosaic_0001>

<llo_original>
// kernel: tpu_custom_call.1
$region0: #{tpu_custom_call.1}
  #allocation0 [shape = 'u32[]', space=smem, size = 0x4, offset = 0x4, fixed_abs, tag = 'smem constant byte address 0x4 - core index']
  #allocation1 [shape = 'u32[144,128]{1,0:T(1,128)}', space=vmem, size = 0x12000, scoped, tag = 'internal scratch']
  #allocation2 [shape = 's32[1]{0}', space=sflag, size = 0x4, scoped, tag = 'scoped memory for tpu_custom_call.1']
  #allocation3 [shape = 's32[1]{0:T(128)S(6)}', space=smem, size = 0x200, scoped, tag = 'prefetched SMEM operand 0']
  #allocation4 [shape = 'u8[512]{0}', space=smem, size = 0x200, scoped, tag = 'prefetched SMEM operand 1']
  %s0 = inlined_call_operand.<no memory space> [shape: s32[1], index: 0, kind: input, shape index: {}]
  %s1 = inlined_call_operand.vmem [shape: f32[2], index: 1, kind: input, shape index: {}]
  %s2 = inlined_call_operand.hbm [shape: f32[16,128], index: 2, kind: input, shape index: {}]
  %s3 = inlined_call_operand.hbm [shape: f32[16,128], index: 3, kind: output, shape index: {}]
  %s4 = sld [smem:[#allocation0]]
  $region18: #{tpu_custom_call.1} parent=0
    _
  %s6 = ssub.s32 1, %s4
  %s7 = scalar_select 0, %s6, %s4
  %8 = sst [smem:[#allocation3]] %s0
  %s9 = sshll.u32 %s1, 4
  %s10 = int_to_ptr.vmem [resolvable:$true] %s9
  %12 = dma.vmem_to_smem %s10, 16, [#allocation4], [#allocation2]
  %13 = dma.done [#allocation2], 16
  %14 = sfence
  $region1: #{tpu_custom_call.1} parent=0
    #allocation5 [shape = 'u8[8192]{0}', space=vmem, size = 0x2000, scoped, tag = 'input window, operand 2, single buffered']
    #allocation6 [shape = 's32[1]{0}', space=sflag, size = 0x4, scoped, tag = 'scoped memory for tpu_custom_call.1']
    #allocation7 [shape = 's32[1]{0}', space=sflag, size = 0x4, scoped, tag = 'scoped memory for tpu_custom_call.1']
    #allocation8 [shape = 'u8[8192]{0}', space=vmem, size = 0x2000, scoped, tag = 'output window, operand 0, single buffered']
    %15 = vsyncpa [#allocation6], 0
    %16 = vsyncpa [#allocation7], 0
    // Predicated region
    $region2: #{tpu_custom_call.1} parent=1 // pred_check
      _
    $region3: #{tpu_custom_call.1} parent=1 // pred_check_branch
      %18 = sbr.rel (0) target = $region5
    $region4: #{tpu_custom_call.1} parent=1 // pred_region
      %s20 = ssub.s32 256, 256
      %21 = vsyncadd [#allocation6], %s20
      %s22 = sshll.u32 [#allocation5], 4
      %s23 = int_to_ptr.vmem [resolvable:$true] %s22
      %28 = dma.hbm_to_vmem [thread:$0]  %s2, 256, %s23, [#allocation6], 128, 128, 8
    $region5: #{tpu_custom_call.1} parent=1 // pred_fallthru
      _
    // Predicated region
    $region6: #{tpu_custom_call.1} parent=1 // pred_check
      _
    $region7: #{tpu_custom_call.1} parent=1 // pred_check_branch
      %30 = sbr.rel (0) target = $region9
    $region8: #{tpu_custom_call.1} parent=1 // pred_region
      %31 = dma.done [#allocation6], 256
    $region9: #{tpu_custom_call.1} parent=1 // pred_fallthru
      _
    %v32 = vlaneseq
    %v33 = vshrl.u32 %v32, 7
    %v34 = vlaneseq
    %v35 = vand.u32 %v34, 127
    %s36 = smul.u32 0, 1024
    %v37 = vmul.u32 %v33, 128
    %v38 = vstv %s36
    %v39 = vadd.s32 %v38, %v37
    %v40 = vadd.s32 %v39, %v35
    %s41 = sld [smem:[#allocation3]]
    %s42 = smul.u32 %s41, 2654435769
    %v43 = vstv %s42
    %v44 = vadd.s32 %v40, %v43
    %v45 = vxor.u32 %v44, 2245074363
    %v46 = vshrl.u32 %v45, 16
    %v47 = vxor.u32 %v45, %v46
    %v48 = vmul.u32 %v47, 2146121005
    %v49 = vshrl.u32 %v48, 15
    %v50 = vxor.u32 %v48, %v49
    %v51 = vmul.u32 %v50, 2221516427
    %v52 = vshrl.u32 %v51, 16
    %v53 = vxor.u32 %v51, %v52
    %v54 = vshrl.u32 %v53, 16
    %v55 = vxor.u32 %v53, %v54
    %v56 = vmul.u32 %v55, 2654435769
    %v57 = vshrl.u32 %v53, 9
    %v58 = vor.u32 %v57, 1065353216
    %v60 = vsub.f32 2.0, %v58
    %v61 = vshrl.u32 %v56, 9
    %v62 = vor.u32 %v61, 1065353216
    %v64 = vsub.f32 %v62, 1.0
    %v65 = vlog2.pop %v60
    %v66 = vmul.f32 %v65, 0.6931472
    %v67 = vmul.f32 %v66, -2.0
    %v68 = vrsqrt.pop %v67
    %v69 = vmul.f32 %v67, %v68
    %vm70 = vcmp.eq.f32.partialorder %v67, inf
    %v71 = vsel %vm70, %v67, %v69
    %vm72 = vcmp.eq.f32.partialorder %v67, 0.0
    %v73 = vand.u32 %v67, 2147483648
    %v74 = vsel %vm72, %v73, %v71
    %v75 = vsub.f32 %v64, 0.5
    %v76 = vand.u32 2147483647, %v75
    %vm77 = vcmp.gt.f32.partialorder %v76, 0.25
    %v78 = vsub.f32 0.5, %v76
    %v79 = vsel %vm77, %v78, %v76
    %v80 = vmul.f32 %v79, 6.2831855
    %v81 = vmul.f32 %v80, %v80
    %v82 = vmul.f32 %v81, 2.4801588e-05
    %v83 = vadd.f32 %v82, -0.0013888889
    %v84 = vmul.f32 %v81, %v83
    %v85 = vadd.f32 %v84, 0.041666668
    %v86 = vmul.f32 %v81, %v85
    %v87 = vadd.f32 %v86, -0.5
    %v88 = vmul.f32 %v81, %v87
    %v89 = vadd.f32 %v88, 1.0
    %v90 = vsub.f32 0.0, %v89
    %v91 = vsel %vm77, %v89, %v90
    %v92 = vmul.f32 %v74, %v91
    %vm93 = vcmp.ge.f32.partialorder %v64, 0.25
    %v94 = vsub.f32 %v64, 0.25
    %v95 = vadd.f32 %v64, 0.75
    %v96 = vsel %vm93, %v94, %v95
    %v97 = vsub.f32 %v96, 0.5
    %v98 = vand.u32 2147483647, %v97
    %vm99 = vcmp.gt.f32.partialorder %v98, 0.25
    %v100 = vsub.f32 0.5, %v98
    %v101 = vsel %vm99, %v100, %v98
    %v102 = vmul.f32 %v101, 6.2831855
    %v103 = vmul.f32 %v102, %v102
    %v104 = vmul.f32 %v103, 2.4801588e-05
    %v105 = vadd.f32 %v104, -0.0013888889
    %v106 = vmul.f32 %v103, %v105
    %v107 = vadd.f32 %v106, 0.041666668
    %v108 = vmul.f32 %v103, %v107
    %v109 = vadd.f32 %v108, -0.5
    %v110 = vmul.f32 %v103, %v109
    %v111 = vadd.f32 %v110, 1.0
    %v112 = vsub.f32 0.0, %v111
    %v113 = vsel %vm99, %v111, %v112
    %v114 = vmul.f32 %v74, %v113
    %s115 = sld [smem:[#allocation4]]
    %s116 = sld [smem:[#allocation4 + $0x1]]
    %v117 = vld [vmem:[#allocation5] sm:$0xff]
    %v118 = vstv %s115
    %v119 = vmul.f32 %v92, %v118
    %v120 = vadd.f32 %v117, %v119
    %v121 = vstv %s116
    %v122 = vadd.f32 %v120, %v121
    %v123 = vld [vmem:[#allocation5 + $0x8] sm:$0xff]
    %v124 = vmul.f32 %v114, %v118
    %v125 = vadd.f32 %v123, %v124
    %v126 = vadd.f32 %v125, %v121
    %127 = vst [vmem:[#allocation8] sm:$0xff] %v122
    %128 = vst [vmem:[#allocation8 + $0x8] sm:$0xff] %v126
    // Predicated region
    $region10: #{tpu_custom_call.1} parent=1 // pred_check
      _
    $region11: #{tpu_custom_call.1} parent=1 // pred_check_branch
      %130 = sbr.rel (0) target = $region13
    $region12: #{tpu_custom_call.1} parent=1 // pred_region
      %s132 = ssub.s32 256, 256
      %133 = vsyncadd [#allocation7], %s132
      %s134 = sshll.u32 [#allocation8], 4
      %s135 = int_to_ptr.vmem [resolvable:$true] %s134
      %140 = dma.vmem_to_hbm [thread:$0]  %s135, 256, %s3, [#allocation7], 128, 128, 8
    $region13: #{tpu_custom_call.1} parent=1 // pred_fallthru
      _
    // Predicated region
    $region14: #{tpu_custom_call.1} parent=1 // pred_check
      _
    $region15: #{tpu_custom_call.1} parent=1 // pred_check_branch
      %142 = sbr.rel (0) target = $region17
    $region16: #{tpu_custom_call.1} parent=1 // pred_region
      %143 = dma.done [#allocation7], 256
    $region17: #{tpu_custom_call.1} parent=1 // pred_fallthru
      _
    %144 = vsyncpa [#allocation6], 1
    %145 = vsyncpa [#allocation7], 1

</llo_original>
